<compile_context>
chip_gen: v6e
topology: v6e:2x2x1
jax: 0.10.0
libtpu: 0.0.40
codegen_flags: <defaults>
</compile_context>

<pallas_src>
import functools
import math

import jax
import jax.numpy as jnp
from jax import lax
from jax.experimental import pallas as pl
from jax.experimental.pallas import tpu as pltpu

# 48 MiB: headroom under v7x's 64 MiB physical VMEM; comfortably within v5e/v6e's 128 MiB.
VMEM_LIMIT = 48 * 1024 * 1024


# ----------------------------------------------------------------------------- helpers
def _gelu_tanh(x):
    c = jnp.float32(0.7978845608028654)  # sqrt(2/pi)
    return 0.5 * x * (1.0 + jnp.tanh(c * (x + 0.044715 * x * x * x)))


def _pick_tile(dim, preferred):
    """Largest 'nice' tile that divides dim (falls back to the full dim)."""
    for t in (preferred, 1024, 512, 256, 128):
        if t <= dim and dim % t == 0:
            return t
    return dim


# ----------------------------------------------------------------------------- AdaLN temb linear (tiny M, bf16 weight stream)
def _linear_kernel(x_ref, w_ref, b_ref, o_ref, acc_ref):
    k = pl.program_id(2)

    @pl.when(k == 0)
    def _():
        acc_ref[...] = jnp.zeros_like(acc_ref)

    acc_ref[...] += jnp.dot(x_ref[...], w_ref[...],
                            preferred_element_type=jnp.float32)

    @pl.when(k == pl.num_programs(2) - 1)
    def _():
        o_ref[...] = (acc_ref[...] + b_ref[...].astype(jnp.float32)).astype(o_ref.dtype)


def pallas_adaln_linear(x, w, b):
    M, K = x.shape
    _, N = w.shape
    tm = M if M < 8 else _pick_tile(M, 256)
    tn = _pick_tile(N, 512)
    tk = _pick_tile(K, 512)
    b2 = b.reshape(1, N).astype(jnp.float32)
    return pl.pallas_call(
        _linear_kernel,
        out_shape=jax.ShapeDtypeStruct((M, N), jnp.float32),
        grid_spec=pltpu.PrefetchScalarGridSpec(
            num_scalar_prefetch=0,
            grid=(M // tm, N // tn, K // tk),
            in_specs=[
                pl.BlockSpec((tm, tk), lambda i, j, k: (i, k)),
                pl.BlockSpec((tk, tn), lambda i, j, k: (k, j)),
                pl.BlockSpec((1, tn), lambda i, j, k: (0, j)),
            ],
            out_specs=pl.BlockSpec((tm, tn), lambda i, j, k: (i, j)),
            scratch_shapes=[pltpu.VMEM((tm, tn), jnp.float32)],
        ),
        compiler_params=pltpu.CompilerParams(
            dimension_semantics=("parallel", "parallel", "arbitrary"),
            vmem_limit_bytes=VMEM_LIMIT),
    )(x, w, b2)


# ----------------------------------------------------------------------------- fused AdaLN modulate + QKV/MLP projection
def _inproj_kernel(x_ref, scale_ref, shift_ref, w_ref, b_ref, o_ref,
                   acc_ref, xn_ref, *, gelu_start_block):
    j = pl.program_id(1)
    k = pl.program_id(2)
    n_k, _, tk = xn_ref.shape

    # Modulated LayerNorm computed once per resident (tm, D) row panel.
    @pl.when((j == 0) & (k == 0))
    def _():
        x = x_ref[...].astype(jnp.float32)                         # (tm, D)
        mean = jnp.mean(x, axis=-1, keepdims=True)
        var = jnp.mean(jnp.square(x - mean), axis=-1, keepdims=True)
        xn = (x - mean) * lax.rsqrt(var + 1e-6)                    # LayerNorm, no affine
        xn = xn * (1.0 + scale_ref[0].astype(jnp.float32)) + shift_ref[0].astype(jnp.float32)
        xn = xn.astype(xn_ref.dtype)
        for kk in range(n_k):                                      # static unroll into K blocks
            xn_ref[kk] = xn[:, kk * tk:(kk + 1) * tk]

    @pl.when(k == 0)
    def _():
        acc_ref[...] = jnp.zeros_like(acc_ref)

    acc_ref[...] += jnp.dot(xn_ref[k], w_ref[...],
                            preferred_element_type=jnp.float32)

    is_last = k == pl.num_programs(2) - 1

    @pl.when(is_last & (j < gelu_start_block))                     # qkv columns: no activation
    def _():
        o_ref[...] = (acc_ref[...] + b_ref[...].astype(jnp.float32)).astype(o_ref.dtype)

    @pl.when(is_last & (j >= gelu_start_block))                    # mlp columns: gelu(tanh)
    def _():
        o_ref[...] = _gelu_tanh(acc_ref[...]
                                + b_ref[...].astype(jnp.float32)).astype(o_ref.dtype)


def pallas_fused_in_proj(x2d, scale, shift, w, b, *, D, S):
    M, _ = x2d.shape                                               # (B*S, D)
    _, N = w.shape                                                 # 7D
    tm = _pick_tile(S, 1024)
    tn = _pick_tile(D, 512)
    tk = _pick_tile(D, 512)
    assert (3 * D) % tn == 0 and D % tk == 0 and S % tm == 0
    n_k = D // tk
    rows_per_batch = S // tm
    gelu_start_block = (3 * D) // tn
    b2 = b.reshape(1, N).astype(jnp.float32)

    kernel = functools.partial(_inproj_kernel, gelu_start_block=gelu_start_block)
    bvec_spec = pl.BlockSpec((1, 1, D), lambda i, j, k: (i // rows_per_batch, 0, 0))
    return pl.pallas_call(
        kernel,
        out_shape=jax.ShapeDtypeStruct((M, N), jnp.bfloat16),
        grid_spec=pltpu.PrefetchScalarGridSpec(
            num_scalar_prefetch=0,
            grid=(M // tm, N // tn, n_k),
            in_specs=[
                pl.BlockSpec((tm, D), lambda i, j, k: (i, 0)),     # resident activation panel
                bvec_spec,                                         # scale (B,1,D)
                bvec_spec,                                         # shift (B,1,D)
                pl.BlockSpec((tk, tn), lambda i, j, k: (k, j)),
                pl.BlockSpec((1, tn), lambda i, j, k: (0, j)),
            ],
            out_specs=pl.BlockSpec((tm, tn), lambda i, j, k: (i, j)),
            scratch_shapes=[pltpu.VMEM((tm, tn), jnp.float32),
                            pltpu.VMEM((n_k, tm, tk), jnp.bfloat16)],
        ),
        compiler_params=pltpu.CompilerParams(
            dimension_semantics=("parallel", "arbitrary", "arbitrary"),
            vmem_limit_bytes=VMEM_LIMIT),
    )(x2d, scale, shift, w, b2)


# ----------------------------------------------------------------------------- q/k prep (RMSNorm + half-rotation RoPE + scale)
def _qk_prep_kernel(q_ref, k_ref, wq_ref, wk_ref, ra_ref, rb_ref,
                    qo_ref, ko_ref, *, q_scale):
    half = q_ref.shape[-1] // 2
    ra = ra_ref[...].astype(jnp.float32)
    rb = rb_ref[...].astype(jnp.float32)

    def _prep(x_ref, w_ref):
        x = x_ref[...].astype(jnp.float32)
        x = x * lax.rsqrt(jnp.mean(x * x, axis=-1, keepdims=True) + 1e-6)
        x = x * w_ref[...].astype(jnp.float32)
        return ra * x + rb * pltpu.roll(x, shift=half, axis=1)      # half-rotation RoPE

    qo_ref[...] = (_prep(q_ref, wq_ref) * q_scale).astype(qo_ref.dtype)
    ko_ref[...] = _prep(k_ref, wk_ref).astype(ko_ref.dtype)


def pallas_qk_prep(qkvm, wq, wk, rope_a, rope_b, *, B, S, H, Dh):
    ts = _pick_tile(S, 512)
    n_s = S // ts
    kernel = functools.partial(_qk_prep_kernel, q_scale=1.0 / math.sqrt(Dh))
    out_sd = jax.ShapeDtypeStruct((B, H, S, Dh), jnp.bfloat16)
    q_spec = pl.BlockSpec((ts, Dh), lambda s, b, h: (b * n_s + s, h))
    k_spec = pl.BlockSpec((ts, Dh), lambda s, b, h: (b * n_s + s, H + h))
    w_spec = pl.BlockSpec((1, Dh), lambda s, b, h: (0, 0))
    r_spec = pl.BlockSpec((ts, Dh), lambda s, b, h: (s, 0))        # rope fetched once per s-tile
    o_spec = pl.BlockSpec((None, None, ts, Dh), lambda s, b, h: (b, h, s, 0))
    return pl.pallas_call(
        kernel,
        out_shape=(out_sd, out_sd),
        grid_spec=pltpu.PrefetchScalarGridSpec(
            num_scalar_prefetch=0,
            grid=(n_s, B, H),
            in_specs=[q_spec, k_spec, w_spec, w_spec, r_spec, r_spec],
            out_specs=(o_spec, o_spec),
        ),
        compiler_params=pltpu.CompilerParams(
            dimension_semantics=("parallel", "parallel", "parallel"),
            vmem_limit_bytes=VMEM_LIMIT),
    )(qkvm, qkvm, wq, wk, rope_a, rope_b)


# ----------------------------------------------------------------------------- flash attention (K/V resident per head)
def _flash_attn_kernel(q_ref, k_ref, v_ref, o_ref, m_sc, l_sc, acc_sc, *, tkv):
    n_kv = k_ref.shape[0] // tkv
    m_sc[...] = jnp.full_like(m_sc, -jnp.inf)
    l_sc[...] = jnp.zeros_like(l_sc)
    acc_sc[...] = jnp.zeros_like(acc_sc)
    q = q_ref[...]                                                 # (tq, Dh) bf16, pre-scaled

    @pl.loop(0, n_kv)
    def _(ki):
        off = pl.multiple_of(ki * tkv, tkv)
        k = k_ref[pl.ds(off, tkv), :]                              # (tkv, Dh) bf16
        v = v_ref[pl.ds(off, tkv), :]                              # (tkv, Dh) bf16
        s = lax.dot_general(q, k, (((1,), (1,)), ((), ())),
                            preferred_element_type=jnp.float32)    # (tq, tkv)
        m_prev = m_sc[...]
        m_new = jnp.maximum(m_prev, jnp.max(s, axis=-1, keepdims=True))
        alpha = jnp.exp(m_prev - m_new)
        p = jnp.exp(s - m_new)
        l_sc[...] = alpha * l_sc[...] + jnp.sum(p, axis=-1, keepdims=True)
        acc_sc[...] = alpha * acc_sc[...] + jnp.dot(
            p.astype(jnp.bfloat16), v, preferred_element_type=jnp.float32)
        m_sc[...] = m_new

    o_ref[...] = (acc_sc[...] * pl.reciprocal(l_sc[...], approx=True)).astype(o_ref.dtype)


def pallas_flash_attention(q_prep, k_prep, qkvm, *, B, S, H, Dh, D):
    # q_prep/k_prep: (B, H, S, Dh) bf16 (RMS+RoPE already applied); v comes straight from qkvm.
    tq = _pick_tile(S, 256)
    tkv = _pick_tile(S, 1024)
    n_q = S // tq
    kernel = functools.partial(_flash_attn_kernel, tkv=tkv)
    return pl.pallas_call(
        kernel,
        out_shape=jax.ShapeDtypeStruct((B * S, D), jnp.bfloat16),
        grid_spec=pltpu.PrefetchScalarGridSpec(
            num_scalar_prefetch=0,
            grid=(B, H, n_q),
            in_specs=[
                pl.BlockSpec((None, None, tq, Dh), lambda b, h, qi: (b, h, qi, 0)),
                pl.BlockSpec((None, None, S, Dh), lambda b, h, qi: (b, h, 0, 0)),  # resident K
                pl.BlockSpec((S, Dh), lambda b, h, qi: (b, 2 * H + h)),            # resident V
            ],
            out_specs=pl.BlockSpec((tq, Dh), lambda b, h, qi: (b * n_q + qi, h)),
            scratch_shapes=[pltpu.VMEM((tq, 1), jnp.float32),
                            pltpu.VMEM((tq, 1), jnp.float32),
                            pltpu.VMEM((tq, Dh), jnp.float32)],
        ),
        compiler_params=pltpu.CompilerParams(
            dimension_semantics=("parallel", "parallel", "parallel"),
            vmem_limit_bytes=VMEM_LIMIT),
    )(q_prep, k_prep, qkvm)


# ----------------------------------------------------------------------------- output projection (+ gate, + residual, no concat)
def _outproj_kernel(attn_ref, mlp_ref, w_ref, b_ref, res_ref, gate_ref,
                    o_ref, acc_ref, *, kb_attn):
    k = pl.program_id(2)

    @pl.when(k == 0)
    def _():
        acc_ref[...] = jnp.zeros_like(acc_ref)

    @pl.when(k < kb_attn)                                          # attention half of W_out
    def _():
        acc_ref[...] += jnp.dot(attn_ref[...], w_ref[...],
                                preferred_element_type=jnp.float32)

    @pl.when(k >= kb_attn)                                         # mlp half of W_out
    def _():
        acc_ref[...] += jnp.dot(mlp_ref[...], w_ref[...],
                                preferred_element_type=jnp.float32)

    @pl.when(k == pl.num_programs(2) - 1)
    def _():
        out = acc_ref[...] + b_ref[...].astype(jnp.float32)
        out = res_ref[...].astype(jnp.float32) + gate_ref[0].astype(jnp.float32) * out
        o_ref[...] = out.astype(o_ref.dtype)


def pallas_out_proj(attn, qkvm, w, b, residual2d, gate, *, D, S):
    M = attn.shape[0]
    K_total, N = w.shape                                           # (5D, D)
    tm = _pick_tile(S, 1024)
    tn = _pick_tile(N, 1024)
    tk = _pick_tile(D, 512)
    assert D % tk == 0 and (3 * D) % tk == 0 and S % tm == 0
    kb_attn = D // tk
    mlp_blk0 = (3 * D) // tk                                       # mlp column block offset in qkvm
    rows_per_batch = S // tm
    b2 = b.reshape(1, N).astype(jnp.float32)
    gate3 = gate[:, None, :]                                       # (B, 1, D)

    kernel = functools.partial(_outproj_kernel, kb_attn=kb_attn)
    return pl.pallas_call(
        kernel,
        out_shape=jax.ShapeDtypeStruct((M, N), jnp.float32),
        grid_spec=pltpu.PrefetchScalarGridSpec(
            num_scalar_prefetch=0,
            grid=(M // tm, N // tn, K_total // tk),
            in_specs=[
                pl.BlockSpec((tm, tk),
                             lambda i, j, k: (i, jnp.minimum(k, kb_attn - 1))),
                pl.BlockSpec((tm, tk),
                             lambda i, j, k: (i, mlp_blk0 + jnp.maximum(k - kb_attn, 0))),
                pl.BlockSpec((tk, tn), lambda i, j, k: (k, j)),
                pl.BlockSpec((1, tn), lambda i, j, k: (0, j)),
                pl.BlockSpec((tm, tn), lambda i, j, k: (i, j)),
                pl.BlockSpec((1, 1, tn),
                             lambda i, j, k: (i // rows_per_batch, 0, j)),
            ],
            out_specs=pl.BlockSpec((tm, tn), lambda i, j, k: (i, j)),
            scratch_shapes=[pltpu.VMEM((tm, tn), jnp.float32)],
        ),
        compiler_params=pltpu.CompilerParams(
            dimension_semantics=("parallel", "parallel", "arbitrary"),
            vmem_limit_bytes=VMEM_LIMIT),
    )(attn, qkvm, w, b2, residual2d, gate3)


# ----------------------------------------------------------------------------- one-time parameter preprocessing
def prepare_params(params):
    """Fuse / permute / cast weights once (not per forward)."""
    D = params["q_w"].shape[0]
    H = params["num_heads"]
    Dh = D // H
    half = Dh // 2

    # Half-rotation RoPE layout: per head, put even lanes first, odd lanes second.
    perm = jnp.concatenate([jnp.arange(half) * 2, jnp.arange(half) * 2 + 1])
    col_perm = (jnp.arange(H)[:, None] * Dh + perm[None, :]).reshape(-1)

    q_w = params["q_w"][:, col_perm]
    q_b = params["q_b"][col_perm]
    k_w = params["k_w"][:, col_perm]
    k_b = params["k_b"][col_perm]

    w_fused = jnp.concatenate([q_w, k_w, params["v_w"], params["mlp_w"]],
                              axis=1).astype(jnp.bfloat16)         # (D, 7D)
    b_fused = jnp.concatenate([q_b, k_b, params["v_b"], params["mlp_b"]]).astype(jnp.float32)

    return {
        "num_heads": H,
        "adaln_w": params["adaln_w"].astype(jnp.bfloat16),
        "adaln_b": params["adaln_b"].astype(jnp.float32),
        "w_fused": w_fused,
        "b_fused": b_fused,
        "rms_q_w": params["rms_q_w"][perm].reshape(1, Dh).astype(jnp.float32),
        "rms_k_w": params["rms_k_w"][perm].reshape(1, Dh).astype(jnp.float32),
        "out_w": params["out_w"].astype(jnp.bfloat16),              # (5D, D)
        "out_b": params["out_b"].astype(jnp.float32),
    }


# ----------------------------------------------------------------------------- full block (Pallas pipeline)
def flux_single_block_forward(prep, hidden_states, temb, image_rotary_emb):
    B, S, D = hidden_states.shape
    H = prep["num_heads"]
    Dh = D // H

    # AdaLayerNormZeroSingle: Linear(SiLU(temb)) -> shift, scale, gate
    emb = pallas_adaln_linear(jax.nn.silu(temb).astype(jnp.bfloat16),
                              prep["adaln_w"], prep["adaln_b"])
    shift, scale, gate = jnp.split(emb, 3, axis=-1)                # each (B, D) f32

    x2d = hidden_states.reshape(B * S, D)                          # f32, LN input + residual

    # Fused AdaLN modulate + QKV/MLP projection (gelu on mlp column blocks).
    qkvm = pallas_fused_in_proj(x2d, scale[:, None, :], shift[:, None, :],
                                prep["w_fused"], prep["b_fused"], D=D, S=S)

    # RoPE coefficients in half-rotation layout (matches the permuted q/k weight columns):
    #   a = [m00 | m11], b = [m01 | m10], partner = roll(x, Dh//2).
    fr = image_rotary_emb[0, :S, 0].astype(jnp.float32)            # (S, Dh//2, 2, 2)
    rope_a = jnp.concatenate([fr[..., 0, 0], fr[..., 1, 1]], axis=-1)   # (S, Dh)
    rope_b = jnp.concatenate([fr[..., 0, 1], fr[..., 1, 0]], axis=-1)   # (S, Dh)

    # RMSNorm + RoPE + 1/sqrt(Dh) hoisted out of the attention loop.
    q_prep, k_prep = pallas_qk_prep(qkvm, prep["rms_q_w"], prep["rms_k_w"],
                                    rope_a, rope_b, B=B, S=S, H=H, Dh=Dh)

    # Flash attention with per-head VMEM-resident K/V and an in-kernel kv loop.
    attn = pallas_flash_attention(q_prep, k_prep, qkvm, B=B, S=S, H=H, Dh=Dh, D=D)

    # Output projection over [attn | mlp] without a concat, fused gate*proj + residual.
    out2d = pallas_out_proj(attn, qkvm, prep["out_w"], prep["out_b"],
                            x2d, gate, D=D, S=S)
    return out2d.reshape(B, S, D)


# ----------------------------------------------------------------------------- pure-JAX reference (for correctness check)
def reference_forward(params, hidden_states, temb, image_rotary_emb):
    B, S, D = hidden_states.shape
    H = params["num_heads"]
    Dh = D // H
    residual = hidden_states

    emb = jax.nn.silu(temb) @ params["adaln_w"] + params["adaln_b"]
    shift, scale, gate = jnp.split(emb, 3, axis=-1)
    mean = hidden_states.mean(-1, keepdims=True)
    var = jnp.mean((hidden_states - mean) ** 2, -1, keepdims=True)
    xn = (hidden_states - mean) / jnp.sqrt(var + 1e-6)
    nh = xn * (1.0 + scale[:, None, :]) + shift[:, None, :]

    mlp = _gelu_tanh(nh @ params["mlp_w"] + params["mlp_b"])

    def heads(x):
        return x.reshape(B, S, H, Dh)

    q = heads(nh @ params["q_w"] + params["q_b"])
    k = heads(nh @ params["k_w"] + params["k_b"])
    v = heads(nh @ params["v_w"] + params["v_b"])

    def rms(x, w):
        return x * lax.rsqrt(jnp.mean(x * x, -1, keepdims=True) + 1e-6) * w

    q = rms(q, params["rms_q_w"])
    k = rms(k, params["rms_k_w"])

    fr = image_rotary_emb[:, :S]                                   # (1,S,1,Dh/2,2,2)

    def rope(x):
        xp = x.reshape(B, S, H, Dh // 2, 1, 2)
        out = fr[..., 0] * xp[..., 0] + fr[..., 1] * xp[..., 1]
        return out.reshape(B, S, H, Dh)

    q, k = rope(q), rope(k)
    qh, kh, vh = (t.transpose(0, 2, 1, 3) for t in (q, k, v))
    s = jnp.einsum("bhqd,bhkd->bhqk", qh, kh) / jnp.sqrt(jnp.float32(Dh))
    p = jax.nn.softmax(s, axis=-1)
    attn = jnp.einsum("bhqk,bhkd->bhqd", p, vh).transpose(0, 2, 1, 3).reshape(B, S, D)

    cat = jnp.concatenate([attn, mlp], axis=-1)
    return residual + gate[:, None, :] * (cat @ params["out_w"] + params["out_b"])


# ----------------------------------------------------------------------------- deterministic parameter init
def init_params(key, dim, num_heads):
    head_dim = dim // num_heads
    mlp_dim = 4 * dim
    ks = jax.random.split(key, 12)

    def w(k, shape, s=0.02):
        return jax.random.normal(k, shape, jnp.float32) * s

    return {
        "num_heads": num_heads,
        "adaln_w": w(ks[0], (dim, 3 * dim)), "adaln_b": w(ks[1], (3 * dim,)),
        "mlp_w": w(ks[2], (dim, mlp_dim)),   "mlp_b": w(ks[3], (mlp_dim,)),
        "q_w": w(ks[4], (dim, dim)), "q_b": w(ks[5], (dim,)),
        "k_w": w(ks[6], (dim, dim)), "k_b": w(ks[7], (dim,)),
        "v_w": w(ks[8], (dim, dim)), "v_b": w(ks[9], (dim,)),
        "rms_q_w": jnp.ones((head_dim,), jnp.float32),
        "rms_k_w": jnp.ones((head_dim,), jnp.float32),
        "out_w": w(ks[10], (dim + mlp_dim, dim)), "out_b": w(ks[11], (dim,)),
    }


if __name__ == "__main__":
    # Small, shape-consistent stand-in for Flux (real: D=3072, H=24, Dh=128, S=4096+).
    B, S, D, H = 2, 256, 256, 2
    Dh = D // H     # 128, same head_dim as real Flux

    key = jax.random.PRNGKey(0)
    k1, k2, k3, k4 = jax.random.split(key, 4)
    hidden_states = jax.random.normal(k1, (B, S, D), jnp.float32)
    temb = jax.random.normal(k2, (B, D), jnp.float32)
    image_rotary_emb = jax.random.normal(k3, (1, S, 1, Dh // 2, 2, 2), jnp.float32)
    params = init_params(k4, D, H)
    prepped = prepare_params(params)     # one-time weight fusion / permutation / bf16 casts

    out = flux_single_block_forward(prepped, hidden_states, temb, image_rotary_emb)
    out = jax.block_until_ready(out)
    assert out.shape == (B, S, D)

    ref = jax.block_until_ready(
        reference_forward(params, hidden_states, temb, image_rotary_emb))
    # bf16 MXU operands (incl. bf16 AdaLN weights) -> loose tolerance vs the f32 reference.
    max_err = float(jnp.max(jnp.abs(out - ref)))
    assert max_err < 3e-2, f"max abs err {max_err}"

    print("KERNEL_OK")
</pallas_src>

<mosaic_0001>
module attributes {stable_mosaic.version = 11 : i64} {
  func.func @_linear_kernel(%arg0: i32, %arg1: i32, %arg2: i32, %arg3: memref<2x256xbf16, #tpu.memory_space<vmem>>, %arg4: memref<256x256xbf16, #tpu.memory_space<vmem>>, %arg5: memref<1x256xf32, #tpu.memory_space<vmem>>, %arg6: memref<2x256xf32, #tpu.memory_space<vmem>>, %arg7: memref<2x256xf32, #tpu.memory_space<vmem>>) attributes {dimension_semantics = [#tpu.dimension_semantics<parallel>, #tpu.dimension_semantics<parallel>, #tpu.dimension_semantics<arbitrary>], iteration_bounds = array<i64: 1, 3, 1>, scalar_prefetch = 0 : i64, scratch_operands = 1 : i64, tpu.core_type = #tpu.core_type<tc>, window_params = [{transform_indices = @transform_0, window_bounds = array<i64: 2, 256>}, {transform_indices = @transform_1, window_bounds = array<i64: 256, 256>}, {transform_indices = @transform_2, window_bounds = array<i64: 1, 256>}, {transform_indices = @transform_3, window_bounds = array<i64: 2, 256>}]} {
    %c0_i32 = arith.constant 0 : i32
    %0 = arith.cmpi eq, %arg2, %c0_i32 : i32
    %1 = arith.extui %0 : i1 to i32
    %c0_i32_0 = arith.constant 0 : i32
    %2 = arith.cmpi ne, %1, %c0_i32_0 : i32
    scf.if %2 {
      %cst_10 = arith.constant 0.000000e+00 : f32
      %12 = vector.broadcast %cst_10 : f32 to vector<2x256xf32>
      %c0_11 = arith.constant 0 : index
      %c0_12 = arith.constant 0 : index
      %13 = vector.load %arg7[%c0_11, %c0_12] : memref<2x256xf32, #tpu.memory_space<vmem>>, vector<2x256xf32>
      tpu.vector_store %arg7[%c0_11, %c0_12], %12 {strides = array<i32>} : memref<2x256xf32, #tpu.memory_space<vmem>>, vector<2x256xf32>,
    } else {
    }
    %c0 = arith.constant 0 : index
    %c0_1 = arith.constant 0 : index
    %3 = vector.load %arg7[%c0, %c0_1] : memref<2x256xf32, #tpu.memory_space<vmem>>, vector<2x256xf32>
    %c0_2 = arith.constant 0 : index
    %c0_3 = arith.constant 0 : index
    %4 = vector.load %arg3[%c0_2, %c0_3] : memref<2x256xbf16, #tpu.memory_space<vmem>>, vector<2x256xbf16>
    %c0_4 = arith.constant 0 : index
    %c0_5 = arith.constant 0 : index
    %5 = vector.load %arg4[%c0_4, %c0_5] : memref<256x256xbf16, #tpu.memory_space<vmem>>, vector<256x256xbf16>
    %cst = arith.constant dense<0.000000e+00> : vector<2x256xf32>
    %6 = tpu.matmul %4, %5, %cst {dimension_numbers = #tpu.dot_dimension_numbers<[1], [0], [0], [1], [0, 0, 1, 1], [], []>} : vector<2x256xbf16>, vector<256x256xbf16>, vector<2x256xf32> -> vector<2x256xf32>
    %7 = arith.addf %3, %6 : vector<2x256xf32>
    %c0_6 = arith.constant 0 : index
    %c0_7 = arith.constant 0 : index
    %8 = vector.load %arg7[%c0_6, %c0_7] : memref<2x256xf32, #tpu.memory_space<vmem>>, vector<2x256xf32>
    tpu.vector_store %arg7[%c0_6, %c0_7], %7 {strides = array<i32>} : memref<2x256xf32, #tpu.memory_space<vmem>>, vector<2x256xf32>,
    %c0_i32_8 = arith.constant 0 : i32
    %9 = arith.cmpi eq, %arg2, %c0_i32_8 : i32
    %10 = arith.extui %9 : i1 to i32
    %c0_i32_9 = arith.constant 0 : i32
    %11 = arith.cmpi ne, %10, %c0_i32_9 : i32
    scf.if %11 {
      %c0_10 = arith.constant 0 : index
      %c0_11 = arith.constant 0 : index
      %12 = vector.load %arg7[%c0_10, %c0_11] : memref<2x256xf32, #tpu.memory_space<vmem>>, vector<2x256xf32>
      %c0_12 = arith.constant 0 : index
      %c0_13 = arith.constant 0 : index
      %13 = vector.load %arg5[%c0_12, %c0_13] : memref<1x256xf32, #tpu.memory_space<vmem>>, vector<1x256xf32>
      %14 = vector.broadcast %13 : vector<1x256xf32> to vector<2x256xf32>
      %15 = arith.addf %12, %14 : vector<2x256xf32>
      %c0_14 = arith.constant 0 : index
      %c0_15 = arith.constant 0 : index
      %16 = vector.load %arg6[%c0_14, %c0_15] : memref<2x256xf32, #tpu.memory_space<vmem>>, vector<2x256xf32>
      tpu.vector_store %arg6[%c0_14, %c0_15], %15 {strides = array<i32>} : memref<2x256xf32, #tpu.memory_space<vmem>>, vector<2x256xf32>,
    } else {
    }
    return
  }
  func.func @transform_0(%arg0: i32, %arg1: i32, %arg2: i32) -> (i32, i32) {
    %c0_i32 = arith.constant 0 : i32
    return %arg0, %arg2 : i32, i32
  }
  func.func @transform_1(%arg0: i32, %arg1: i32, %arg2: i32) -> (i32, i32) {
    %c0_i32 = arith.constant 0 : i32
    return %arg2, %arg1 : i32, i32
  }
  func.func @transform_2(%arg0: i32, %arg1: i32, %arg2: i32) -> (i32, i32) {
    %c0_i32 = arith.constant 0 : i32
    %c0_i32_0 = arith.constant 0 : i32
    return %c0_i32, %arg1 : i32, i32
  }
  func.func @transform_3(%arg0: i32, %arg1: i32, %arg2: i32) -> (i32, i32) {
    %c0_i32 = arith.constant 0 : i32
    return %arg0, %arg1 : i32, i32
  }
}

</mosaic_0001>

<llo_original>
// kernel: tpu_custom_call.1
$region0: #{tpu_custom_call.1}
  #allocation0 [shape = 'u32[]', space=smem, size = 0x4, offset = 0x4, fixed_abs, tag = 'smem constant byte address 0x4 - core index']
  #allocation1 [shape = 'u32[144,128]{1,0:T(1,128)}', space=vmem, size = 0x12000, scoped, tag = 'internal scratch']
  #allocation2 [shape = 'f32[2,256]{1,0:T(2,128)}', space=vmem, size = 0x800, scoped, tag = 'scratch operand']
  %s0 = inlined_call_operand.hbm [shape: bf16[2,256], index: 0, kind: input, shape index: {}]
  %s1 = inlined_call_operand.hbm [shape: bf16[256,768], index: 1, kind: input, shape index: {}]
  %s2 = inlined_call_operand.hbm [shape: f32[1,768], index: 2, kind: input, shape index: {}]
  %s3 = inlined_call_operand.hbm [shape: f32[2,768], index: 3, kind: output, shape index: {}]
  %s4 = sld [smem:[#allocation0]]
  $region65: #{tpu_custom_call.1} parent=0
    _
  %s6 = ssub.s32 1, %s4
  %s7 = scalar_select 0, %s6, %s4
  $region1: #{tpu_custom_call.1} parent=0
    #allocation3 [shape = 'u8[1024]{0}', space=vmem, size = 0x400, scoped, tag = 'input window, operand 0, single buffered']
    #allocation4 [shape = 's32[2]{0}', space=sflag, size = 0x8, scoped, tag = 'scoped memory for tpu_custom_call.1']
    #allocation5 [shape = 's32[2]{0}', space=sflag, size = 0x8, scoped, tag = 'scoped memory for tpu_custom_call.1']
    #allocation6 [shape = 'u8[262144]{0}', space=vmem, size = 0x40000, scoped, tag = 'input window, operand 1']
    #allocation7 [shape = 's32[2]{0}', space=sflag, size = 0x8, scoped, tag = 'scoped memory for tpu_custom_call.1']
    #allocation8 [shape = 'u8[2048]{0}', space=vmem, size = 0x800, scoped, tag = 'input window, operand 2']
    #allocation9 [shape = 'u8[4096]{0}', space=vmem, size = 0x1000, scoped, tag = 'output window, operand 0']
    %8 = vsyncpa [#allocation4], 0
    %9 = vsyncpa [#allocation7], 0
    %s10 = scalar_lea.sflag [#allocation7], 1
    %11 = vsyncpa %s10, 0
    %12 = vsyncpa [#allocation5], 0
    %s13 = scalar_lea.sflag [#allocation5], 1
    %14 = vsyncpa %s13, 0
    loop: start=0, step=1, limit=5
    $region2: #{tpu_custom_call.1} parent=1 // loop_pre_header
      _
    $region3: #{tpu_custom_call.1} parent=1 // loop_header
      %s16 = sphi 0, %s20
      %p17 = scmp.ge.s32.totalorder %s16, 5
      %s23 = sphi 0, %s42
      %s24 = sphi 0, %s38
      %s25 = sphi 0, %s34
      %s26 = sphi 0, %s23
      %s27 = sphi 0, %s24
      %s28 = sphi 0, %s25
      %s29 = sphi 0, %s26
      %s30 = sphi 0, %s27
      %s31 = sphi 0, %s28
      %s47 = sphi 0, %s49
      %s50 = sphi 0, %s47
      %s51 = sphi 0, %s50
      %s67 = sphi 0, %s51
      %s75 = sphi 0, %s77
      %s78 = sphi 0, %s75
      %s79 = sphi 0, %s78
      %s95 = sphi 0, %s79
      %s101 = sphi 0, %s103
      %s104 = sphi 0, %s101
      %s105 = sphi 0, %s104
      %s121 = sphi 0, %s105
      %s129 = sphi 0, %s131
      %s132 = sphi 0, %s129
      %s133 = sphi 0, %s132
      %s149 = sphi 0, %s133
    $region4: #{tpu_custom_call.1} parent=1 // loop_header_branch
      %19 = sbr.rel (%p17) target = $region8
    $region5: #{tpu_custom_call.1} parent=1 // loop_body
      %s21 = ssub.s32 %s16, 1
      %s22 = ssub.s32 %s16, 2
      %s32 = sadd.s32 1, %s25
      %p33 = scmp.ge.s32.totalorder %s32, 1
      %s34 = scalar_select %p33, 0, %s32
      %s35 = sadd.s32 1, %s24
      %s36 = scalar_select %p33, %s35, %s24
      %p37 = scmp.ge.s32.totalorder %s36, 3
      %s38 = scalar_select %p37, 0, %s36
      %s39 = sadd.s32 1, %s23
      %s40 = scalar_select %p37, %s39, %s23
      %p41 = scmp.ge.s32.totalorder %s40, 1
      %s42 = scalar_select %p41, 0, %s40
      %s43 = ssub.s32 %s23, %s42
      %s44 = ssub.s32 %s25, %s34
      %s45 = sor.u32 %s43, %s44
      %p46 = scmp.eq.s32.totalorder %s45, 0
      %s48 = sadd.s32 %s47, 1
      %s49 = scalar_select %p46, %s47, %s48
      %p52 = pneg %p46
      %p53 = scmp.eq.s32.totalorder %s16, 2
      %p54 = por %p52, %p53
      %p55 = scmp.ne.s32.totalorder %s47, %s50
      %p56 = scmp.eq.s32.totalorder %s16, 0
      %p57 = por %p55, %p56
      %p58 = scmp.ne.s32.totalorder %s47, %s50
      %p59 = scmp.eq.s32.totalorder %s21, 2
      %p60 = por %p58, %p59
      %p61 = scmp.ne.s32.totalorder %s50, %s51
      %p62 = scmp.eq.s32.totalorder %s21, 0
      %p63 = por %p61, %p62
      %p64 = scmp.ne.s32.totalorder %s50, %s51
      %p65 = scmp.eq.s32.totalorder %s22, 2
      %p66 = por %p64, %p65
      %p68 = scmp.ne.s32.totalorder %s51, %s67
      %p69 = scmp.eq.s32.totalorder %s22, 0
      %p70 = por %p68, %p69
      %s71 = ssub.s32 %s25, %s34
      %s72 = ssub.s32 %s24, %s38
      %s73 = sor.u32 %s71, %s72
      %p74 = scmp.eq.s32.totalorder %s73, 0
      %s76 = sadd.s32 %s75, 1
      %s77 = scalar_select %p74, %s75, %s76
      %p80 = pneg %p74
      %p81 = scmp.eq.s32.totalorder %s16, 2
      %p82 = por %p80, %p81
      %p83 = scmp.ne.s32.totalorder %s75, %s78
      %p84 = scmp.eq.s32.totalorder %s16, 0
      %p85 = por %p83, %p84
      %p86 = scmp.ne.s32.totalorder %s75, %s78
      %p87 = scmp.eq.s32.totalorder %s21, 2
      %p88 = por %p86, %p87
      %p89 = scmp.ne.s32.totalorder %s78, %s79
      %p90 = scmp.eq.s32.totalorder %s21, 0
      %p91 = por %p89, %p90
      %p92 = scmp.ne.s32.totalorder %s78, %s79
      %p93 = scmp.eq.s32.totalorder %s22, 2
      %p94 = por %p92, %p93
      %p96 = scmp.ne.s32.totalorder %s79, %s95
      %p97 = scmp.eq.s32.totalorder %s22, 0
      %p98 = por %p96, %p97
      %s99 = ssub.s32 %s24, %s38
      %p100 = scmp.eq.s32.totalorder %s99, 0
      %s102 = sadd.s32 %s101, 1
      %s103 = scalar_select %p100, %s101, %s102
      %p106 = pneg %p100
      %p107 = scmp.eq.s32.totalorder %s16, 2
      %p108 = por %p106, %p107
      %p109 = scmp.ne.s32.totalorder %s101, %s104
      %p110 = scmp.eq.s32.totalorder %s16, 0
      %p111 = por %p109, %p110
      %p112 = scmp.ne.s32.totalorder %s101, %s104
      %p113 = scmp.eq.s32.totalorder %s21, 2
      %p114 = por %p112, %p113
      %p115 = scmp.ne.s32.totalorder %s104, %s105
      %p116 = scmp.eq.s32.totalorder %s21, 0
      %p117 = por %p115, %p116
      %p118 = scmp.ne.s32.totalorder %s104, %s105
      %p119 = scmp.eq.s32.totalorder %s22, 2
      %p120 = por %p118, %p119
      %p122 = scmp.ne.s32.totalorder %s105, %s121
      %p123 = scmp.eq.s32.totalorder %s22, 0
      %p124 = por %p122, %p123
      %s125 = ssub.s32 %s23, %s42
      %s126 = ssub.s32 %s24, %s38
      %s127 = sor.u32 %s125, %s126
      %p128 = scmp.eq.s32.totalorder %s127, 0
      %s130 = sadd.s32 %s129, 1
      %s131 = scalar_select %p128, %s129, %s130
      %p134 = pneg %p128
      %p135 = scmp.eq.s32.totalorder %s16, 2
      %p136 = por %p134, %p135
      %p137 = scmp.ne.s32.totalorder %s129, %s132
      %p138 = scmp.eq.s32.totalorder %s16, 0
      %p139 = por %p137, %p138
      %p140 = scmp.ne.s32.totalorder %s129, %s132
      %p141 = scmp.eq.s32.totalorder %s21, 2
      %p142 = por %p140, %p141
      %p143 = scmp.ne.s32.totalorder %s132, %s133
      %p144 = scmp.eq.s32.totalorder %s21, 0
      %p145 = por %p143, %p144
      %p146 = scmp.ne.s32.totalorder %s132, %s133
      %p147 = scmp.eq.s32.totalorder %s22, 2
      %p148 = por %p146, %p147
      %p150 = scmp.ne.s32.totalorder %s133, %s149
      %p151 = scmp.eq.s32.totalorder %s22, 0
      %p152 = por %p150, %p151
      %p153 = scmp.le.s32.totalorder 1, %s16
      %p154 = scmp.lt.s32.totalorder %s16, 4
      %p155 = pnand %p153, %p154
      %p156 = pneg %p155
      // Predicated region
      $region9: #{tpu_custom_call.1} parent=5 // pred_check
        _
      $region10: #{tpu_custom_call.1} parent=5 // pred_check_branch
        %158 = sbr.rel (%p155) target = $region12
      $region11: #{tpu_custom_call.1} parent=5 // pred_region
        %s159 = ssub.s32 %s16, 1
        // Predicated region
        $region13: #{tpu_custom_call.1} parent=11 // pred_check
          %p160 = pneg %p63
        $region14: #{tpu_custom_call.1} parent=11 // pred_check_branch
          %162 = sbr.rel (%p160) target = $region16
        $region15: #{tpu_custom_call.1} parent=11 // pred_region
          %s163 = smul.u32 2, %s28
          %s165 = ssub.s32 32, 32
          %166 = vsyncadd [#allocation4], %s165
          %s167 = smul.addr %s26, 2
          %s168 = sadd.s32 %s163, %s167
          %s169 = smul.addr %s168, 16
          %s170 = scalar_lea.hbm %s0, %s169
          %s172 = sshll.u32 [#allocation3], 4
          %s173 = int_to_ptr.vmem [resolvable:$true] %s172
          %175 = dma.hbm_to_vmem [thread:$0]  %s170, 32, %s173, [#allocation4]
        $region16: #{tpu_custom_call.1} parent=11 // pred_fallthru
          _
      $region12: #{tpu_custom_call.1} parent=5 // pred_fallthru
        _
      %p176 = scmp.lt.s32.totalorder %s16, 3
      // Predicated region
      $region17: #{tpu_custom_call.1} parent=5 // pred_check
        %p177 = pneg %p176
      $region18: #{tpu_custom_call.1} parent=5 // pred_check_branch
        %179 = sbr.rel (%p177) target = $region20
      $region19: #{tpu_custom_call.1} parent=5 // pred_region
        // Predicated region
        $region21: #{tpu_custom_call.1} parent=19 // pred_check
          %p180 = pneg %p85
        $region22: #{tpu_custom_call.1} parent=19 // pred_check_branch
          %182 = sbr.rel (%p180) target = $region24
        $region23: #{tpu_custom_call.1} parent=19 // pred_region
          %s183 = sand.u32 %s16, 1
          %s184 = scalar_lea.sflag [#allocation7], %s183
          %s185 = sand.u32 %s75, 1
          %s186 = smul.addr %s185, 256
          %s187 = scalar_lea.vmem [#allocation6], %s186
          %s188 = smul.u32 32, %s25
          %s189 = smul.u32 2, %s24
          %s191 = ssub.s32 4096, 4096
          %192 = vsyncadd %s184, %s191
          %s193 = smul.addr %s188, 6
          %s194 = sadd.s32 %s189, %s193
          %s195 = smul.addr %s194, 64
          %s196 = scalar_lea.hbm %s1, %s195
          %s197 = sshll.u32 %s187, 4
          %s198 = int_to_ptr.vmem [resolvable:$true] %s197
          %203 = dma.hbm_to_vmem [thread:$0]  %s196, 4096, %s198, %s184, 384, 128, 8
        $region24: #{tpu_custom_call.1} parent=19 // pred_fallthru
          _
        // Predicated region
        $region25: #{tpu_custom_call.1} parent=19 // pred_check
          %p204 = pneg %p111
        $region26: #{tpu_custom_call.1} parent=19 // pred_check_branch
          %206 = sbr.rel (%p204) target = $region28
        $region27: #{tpu_custom_call.1} parent=19 // pred_region
          %s207 = sand.u32 %s16, 1
          %s208 = scalar_lea.sflag [#allocation7], %s207
          %s209 = sand.u32 %s101, 1
          %s210 = smul.addr %s209, 2
          %s211 = scalar_lea.vmem [#allocation8], %s210
          %s212 = smul.u32 2, %s24
          %s214 = ssub.s32 32, 32
          %215 = vsyncadd %s208, %s214
          %s216 = smul.addr %s212, 16
          %s217 = scalar_lea.hbm %s2, %s216
          %s219 = sshll.u32 %s211, 4
          %s220 = int_to_ptr.vmem [resolvable:$true] %s219
          %222 = dma.hbm_to_vmem [thread:$0]  %s217, 32, %s220, %s208
        $region28: #{tpu_custom_call.1} parent=19 // pred_fallthru
          _
      $region20: #{tpu_custom_call.1} parent=5 // pred_fallthru
        _
      %p223 = scmp.le.s32.totalorder 1, %s16
      %p224 = scmp.lt.s32.totalorder %s16, 4
      %p225 = pnand %p223, %p224
      %p226 = pneg %p225
      // Predicated region
      $region29: #{tpu_custom_call.1} parent=5 // pred_check
        _
      $region30: #{tpu_custom_call.1} parent=5 // pred_check_branch
        %228 = sbr.rel (%p225) target = $region32
      $region31: #{tpu_custom_call.1} parent=5 // pred_region
        %s229 = ssub.s32 %s16, 1
        // Predicated region
        $region33: #{tpu_custom_call.1} parent=31 // pred_check
          %p230 = pneg %p63
        $region34: #{tpu_custom_call.1} parent=31 // pred_check_branch
          %232 = sbr.rel (%p230) target = $region36
        $region35: #{tpu_custom_call.1} parent=31 // pred_region
          %233 = dma.done [#allocation4], 32
        $region36: #{tpu_custom_call.1} parent=31 // pred_fallthru
          _
        %s234 = sand.u32 %s21, 1
        %s235 = scalar_lea.sflag [#allocation7], %s234
        %s236 = sand.u32 %s78, 1
        %s237 = smul.addr %s236, 256
        %s238 = scalar_lea.vmem [#allocation6], %s237
        // Predicated region
        $region37: #{tpu_custom_call.1} parent=31 // pred_check
          %p239 = pneg %p91
        $region38: #{tpu_custom_call.1} parent=31 // pred_check_branch
          %241 = sbr.rel (%p239) target = $region40
        $region39: #{tpu_custom_call.1} parent=31 // pred_region
          %242 = dma.done %s235, 4096
        $region40: #{tpu_custom_call.1} parent=31 // pred_fallthru
          _
        %s243 = sand.u32 %s21, 1
        %s244 = scalar_lea.sflag [#allocation7], %s243
        %s245 = sand.u32 %s104, 1
        %s246 = smul.addr %s245, 2
        %s247 = scalar_lea.vmem [#allocation8], %s246
        // Predicated region
        $region41: #{tpu_custom_call.1} parent=31 // pred_check
          %p248 = pneg %p117
        $region42: #{tpu_custom_call.1} parent=31 // pred_check_branch
          %250 = sbr.rel (%p248) target = $region44
        $region43: #{tpu_custom_call.1} parent=31 // pred_region
          %251 = dma.done %s244, 32
        $region44: #{tpu_custom_call.1} parent=31 // pred_fallthru
          _
        %p252 = pneg %p63
        %p253 = pneg %p60
        %s254 = sand.u32 %s21, 1
        %s255 = scalar_lea.sflag [#allocation7], %s254
        %s256 = sand.u32 %s78, 1
        %s257 = smul.addr %s256, 256
        %s258 = scalar_lea.vmem [#allocation6], %s257
        %p259 = pneg %p91
        %p260 = pneg %p88
        %s261 = sand.u32 %s21, 1
        %s262 = scalar_lea.sflag [#allocation7], %s261
        %s263 = sand.u32 %s104, 1
        %s264 = smul.addr %s263, 2
        %s265 = scalar_lea.vmem [#allocation8], %s264
        %p266 = pneg %p117
        %p267 = pneg %p114
        %p268 = pneg %p145
        %p269 = pneg %p142
        %s270 = sand.u32 %s132, 1
        %s271 = scalar_lea.sflag [#allocation5], %s270
        %s272 = sand.u32 %s132, 1
        %s273 = smul.addr %s272, 4
        %s274 = scalar_lea.vmem [#allocation9], %s273
        %s275 = smul.u32 2, %s28
        %s276 = smul.u32 32, %s28
        %s277 = smul.u32 2, %s27
        %s278 = smul.u32 2, %s27
        %s279 = smul.u32 2, %s27
        %p280 = scmp.eq.s32.totalorder %s28, 0
        // Predicated region
        $region45: #{tpu_custom_call.1} parent=31 // pred_check
          %p281 = pneg %p280
        $region46: #{tpu_custom_call.1} parent=31 // pred_check_branch
          %283 = sbr.rel (%p281) target = $region48
        $region47: #{tpu_custom_call.1} parent=31 // pred_region
          %284 = vst [vmem:[#allocation2] sm:$0xf] 0.0
        $region48: #{tpu_custom_call.1} parent=31 // pred_fallthru
          _
        %v285 = vld [vmem:[#allocation2] sm:$0xf]
        %v286 = vld [vmem:[#allocation3] sm:$0x3]
        %v287 = vld [vmem:[%s238] sm:$0xff]
        %v288 = vld [vmem:[%s238 + $0x8] sm:$0xff]
        %v289 = vld [vmem:[%s238 + $0x10] sm:$0xff]
        %v290 = vld [vmem:[%s238 + $0x18] sm:$0xff]
        %v291 = vld [vmem:[%s238 + $0x20] sm:$0xff]
        %v292 = vld [vmem:[%s238 + $0x28] sm:$0xff]
        %v293 = vld [vmem:[%s238 + $0x30] sm:$0xff]
        %v294 = vld [vmem:[%s238 + $0x38] sm:$0xff]
        %v295 = vld [vmem:[%s238 + $0x40] sm:$0xff]
        %v296 = vld [vmem:[%s238 + $0x48] sm:$0xff]
        %v297 = vld [vmem:[%s238 + $0x50] sm:$0xff]
        %v298 = vld [vmem:[%s238 + $0x58] sm:$0xff]
        %v299 = vld [vmem:[%s238 + $0x60] sm:$0xff]
        %v300 = vld [vmem:[%s238 + $0x68] sm:$0xff]
        %v301 = vld [vmem:[%s238 + $0x70] sm:$0xff]
        %v302 = vld [vmem:[%s238 + $0x78] sm:$0xff]
        %v303 = vld [vmem:[%s238 + $0x80] sm:$0xff]
        %v304 = vld [vmem:[%s238 + $0x88] sm:$0xff]
        %v305 = vld [vmem:[%s238 + $0x90] sm:$0xff]
        %v306 = vld [vmem:[%s238 + $0x98] sm:$0xff]
        %v307 = vld [vmem:[%s238 + $0xa0] sm:$0xff]
        %v308 = vld [vmem:[%s238 + $0xa8] sm:$0xff]
        %v309 = vld [vmem:[%s238 + $0xb0] sm:$0xff]
        %v310 = vld [vmem:[%s238 + $0xb8] sm:$0xff]
        %v311 = vld [vmem:[%s238 + $0xc0] sm:$0xff]
        %v312 = vld [vmem:[%s238 + $0xc8] sm:$0xff]
        %v313 = vld [vmem:[%s238 + $0xd0] sm:$0xff]
        %v314 = vld [vmem:[%s238 + $0xd8] sm:$0xff]
        %v315 = vld [vmem:[%s238 + $0xe0] sm:$0xff]
        %v316 = vld [vmem:[%s238 + $0xe8] sm:$0xff]
        %v317 = vld [vmem:[%s238 + $0xf0] sm:$0xff]
        %v318 = vld [vmem:[%s238 + $0xf8] sm:$0xff]
        %v321 = vunpack.c.l.s4 1966171168
        %v322 = vunpack.c.0.s8 %v321
        %v323 = vlaneseq
        %v324 = vshrl.u32 %v323, 7
        %v325 = vsub.s32 %v322, %v324
        %v326 = vrot.slane %v286, %v325
        %v327 = vcombine.high %v326, %v326
        %v329 = vunpack.c.l.s4 1966171168
        %v330 = vunpack.c.0.s8 %v329
        %v331 = vlaneseq
        %v332 = vshrl.u32 %v331, 7
        %v333 = vsub.s32 %v330, %v332
        %v334 = vrot.slane %v326, %v333
        %v336 = vunpack.c.l.s4 1966171168
        %v337 = vunpack.c.0.s8 %v336
        %v338 = vlaneseq
        %v339 = vshrl.u32 %v338, 7
        %v340 = vsub.s32 %v337, %v339
        %v341 = vrot.slane %v327, %v340
        %v376 = vunpack.c.l.b16 %v287
        %v377 = vunpack.c.h.b16 %v287
        %v378 = vunpack.c.l.b16 %v288
        %v379 = vunpack.c.h.b16 %v288
        %v380 = vunpack.c.l.b16 %v289
        %v381 = vunpack.c.h.b16 %v289
        %v382 = vunpack.c.l.b16 %v290
        %v383 = vunpack.c.h.b16 %v290
        %v384 = vunpack.c.l.b16 %v291
        %v385 = vunpack.c.h.b16 %v291
        %v386 = vunpack.c.l.b16 %v292
        %v387 = vunpack.c.h.b16 %v292
        %v388 = vunpack.c.l.b16 %v293
        %v389 = vunpack.c.h.b16 %v293
        %v390 = vunpack.c.l.b16 %v294
        %v391 = vunpack.c.h.b16 %v294
        %v392 = vunpack.c.l.b16 %v295
        %v393 = vunpack.c.h.b16 %v295
        %v394 = vunpack.c.l.b16 %v296
        %v395 = vunpack.c.h.b16 %v296
        %v396 = vunpack.c.l.b16 %v297
        %v397 = vunpack.c.h.b16 %v297
        %v398 = vunpack.c.l.b16 %v298
        %v399 = vunpack.c.h.b16 %v298
        %v400 = vunpack.c.l.b16 %v299
        %v401 = vunpack.c.h.b16 %v299
        %v402 = vunpack.c.l.b16 %v300
        %v403 = vunpack.c.h.b16 %v300
        %v404 = vunpack.c.l.b16 %v301
        %v405 = vunpack.c.h.b16 %v301
        %v406 = vunpack.c.l.b16 %v302
        %v407 = vunpack.c.h.b16 %v302
        %v408 = vunpack.c.l.b16 %v303
        %v409 = vunpack.c.h.b16 %v303
        %v410 = vunpack.c.l.b16 %v304
        %v411 = vunpack.c.h.b16 %v304
        %v412 = vunpack.c.l.b16 %v305
        %v413 = vunpack.c.h.b16 %v305
        %v414 = vunpack.c.l.b16 %v306
        %v415 = vunpack.c.h.b16 %v306
        %v416 = vunpack.c.l.b16 %v307
        %v417 = vunpack.c.h.b16 %v307
        %v418 = vunpack.c.l.b16 %v308
        %v419 = vunpack.c.h.b16 %v308
        %v420 = vunpack.c.l.b16 %v309
        %v421 = vunpack.c.h.b16 %v309
        %v422 = vunpack.c.l.b16 %v310
        %v423 = vunpack.c.h.b16 %v310
        %v424 = vunpack.c.l.b16 %v311
        %v425 = vunpack.c.h.b16 %v311
        %v426 = vunpack.c.l.b16 %v312
        %v427 = vunpack.c.h.b16 %v312
        %v428 = vunpack.c.l.b16 %v313
        %v429 = vunpack.c.h.b16 %v313
        %v430 = vunpack.c.l.b16 %v314
        %v431 = vunpack.c.h.b16 %v314
        %v432 = vunpack.c.l.b16 %v315
        %v433 = vunpack.c.h.b16 %v315
        %v434 = vunpack.c.l.b16 %v316
        %v435 = vunpack.c.h.b16 %v316
        %v436 = vunpack.c.l.b16 %v317
        %v437 = vunpack.c.h.b16 %v317
        %v438 = vunpack.c.l.b16 %v318
        %v439 = vunpack.c.h.b16 %v318
        %v440 = vpack.c.b16 %v378, %v376
        %v441 = vpack.c.b16 %v379, %v377
        %v442 = vpack.c.b16 %v382, %v380
        %v443 = vpack.c.b16 %v383, %v381
        %v444 = vpack.c.b16 %v386, %v384
        %v445 = vpack.c.b16 %v387, %v385
        %v446 = vpack.c.b16 %v390, %v388
        %v447 = vpack.c.b16 %v391, %v389
        %v448 = vpack.c.b16 %v394, %v392
        %v449 = vpack.c.b16 %v395, %v393
        %v450 = vpack.c.b16 %v398, %v396
        %v451 = vpack.c.b16 %v399, %v397
        %v452 = vpack.c.b16 %v402, %v400
        %v453 = vpack.c.b16 %v403, %v401
        %v454 = vpack.c.b16 %v406, %v404
        %v455 = vpack.c.b16 %v407, %v405
        %v456 = vpack.c.b16 %v410, %v408
        %v457 = vpack.c.b16 %v411, %v409
        %v458 = vpack.c.b16 %v414, %v412
        %v459 = vpack.c.b16 %v415, %v413
        %v460 = vpack.c.b16 %v418, %v416
        %v461 = vpack.c.b16 %v419, %v417
        %v462 = vpack.c.b16 %v422, %v420
        %v463 = vpack.c.b16 %v423, %v421
        %v464 = vpack.c.b16 %v426, %v424
        %v465 = vpack.c.b16 %v427, %v425
        %v466 = vpack.c.b16 %v430, %v428
        %v467 = vpack.c.b16 %v431, %v429
        %v468 = vpack.c.b16 %v434, %v432
        %v469 = vpack.c.b16 %v435, %v433
        %v470 = vpack.c.b16 %v438, %v436
        %v471 = vpack.c.b16 %v439, %v437
        %504 = vmatprep.subr.bf16.mxu0 %v455
        %505 = vmatpush1.bf16.msra.mxu0 %v454
        %506 = vmatprep.subr.bf16.mxu0 %v453
        %507 = vmatpush1.bf16.msra.mxu0 %v452
        %508 = vmatprep.subr.bf16.mxu0 %v451
        %509 = vmatpush1.bf16.msra.mxu0 %v450
        %510 = vmatprep.subr.bf16.mxu0 %v449
        %511 = vmatpush1.bf16.msra.mxu0 %v448
        %512 = vmatprep.subr.bf16.mxu0 %v447
        %513 = vmatpush1.bf16.msra.mxu0 %v446
        %514 = vmatprep.subr.bf16.mxu0 %v445
        %515 = vmatpush1.bf16.msra.mxu0 %v444
        %516 = vmatprep.subr.bf16.mxu0 %v443
        %517 = vmatpush1.bf16.msra.mxu0 %v442
        %518 = vmatprep.subr.bf16.mxu0 %v441
        %519 = vmatpush1.bf16.msra.mxu0 %v440
        %520 = vmatprep.subr.bf16.mxu0 %v471
        %521 = vmatpush2.bf16.msra.mxu0 %v470
        %522 = vmatprep.subr.bf16.mxu0 %v469
        %523 = vmatpush2.bf16.msra.mxu0 %v468
        %524 = vmatprep.subr.bf16.mxu0 %v467
        %525 = vmatpush2.bf16.msra.mxu0 %v466
        %526 = vmatprep.subr.bf16.mxu0 %v465
        %527 = vmatpush2.bf16.msra.mxu0 %v464
        %528 = vmatprep.subr.bf16.mxu0 %v463
        %529 = vmatpush2.bf16.msra.mxu0 %v462
        %530 = vmatprep.subr.bf16.mxu0 %v461
        %531 = vmatpush2.bf16.msra.mxu0 %v460
        %532 = vmatprep.subr.bf16.mxu0 %v459
        %533 = vmatpush2.bf16.msra.mxu0 %v458
        %534 = vmatprep.subr.bf16.mxu0 %v457
        %535 = vmatpush2.bf16.msra.mxu0 %v456
        %536 = vmatprep.mubr.bf16.mxu0 %v341
        %537 = vmatmul.mubr.bf16.gmra.mxu0 %v334
        %v538 = vpop.f32.mrf.mxu0
        %v539 = vadd.f32 0.0, %v538
        %v540 = vpop.f32.mrf.mxu0
        %v541 = vadd.f32 0.0, %v540
        %v542 = vpop.f32.mrf.mxu0
        %v543 = vpop.f32.mrf.mxu0
        %544 = vdwg.mxu0
        %v547 = vcombine.low %v539, %v541
        %v549 = vunpack.c.l.s4 1983009808
        %v550 = vunpack.c.0.s8 %v549
        %v551 = vlaneseq
        %v552 = vshrl.u32 %v551, 7
        %v553 = vsub.s32 %v550, %v552
        %v554 = vrot.slane %v547, %v553
        %v556 = vadd.f32 %v285, %v554
        %557 = vst [vmem:[#allocation2] sm:$0xf] %v556
        // Predicated region
        $region49: #{tpu_custom_call.1} parent=31 // pred_check
          %p558 = pneg %p280
        $region50: #{tpu_custom_call.1} parent=31 // pred_check_branch
          %560 = sbr.rel (%p558) target = $region52
        $region51: #{tpu_custom_call.1} parent=31 // pred_region
          %v561 = vld [vmem:[#allocation2] sm:$0xf]
          %v562 = vld [vmem:[%s247] sm:$0x3]
          %v564 = vlaneseq
          %v565 = vshrl.u32 %v564, 7
          %v566 = vsub.s32 0, %v565
          %v567 = vrot.slane %v562, %v566
          %v568 = vlaneseq
          %v569 = vshrl.u32 %v568, 7
          %v570 = vsub.s32 1, %v569
          %v571 = vrot.slane %v562, %v570
          %v572 = vcombine.low %v567, %v571
          %v574 = vunpack.c.l.s4 1983009808
          %v575 = vunpack.c.0.s8 %v574
          %v576 = vlaneseq
          %v577 = vshrl.u32 %v576, 7
          %v578 = vsub.s32 %v575, %v577
          %v579 = vrot.slane %v572, %v578
          %v581 = vadd.f32 %v561, %v579
          %582 = vst [vmem:[%s274] sm:$0xf] %v581
        $region52: #{tpu_custom_call.1} parent=31 // pred_fallthru
          _
        %s583 = sand.u32 %s132, 1
        %s584 = scalar_lea.sflag [#allocation5], %s583
        %s585 = sand.u32 %s132, 1
        %s586 = smul.addr %s585, 4
        %s587 = scalar_lea.vmem [#allocation9], %s586
        // Predicated region
        $region53: #{tpu_custom_call.1} parent=31 // pred_check
          %p588 = pneg %p142
        $region54: #{tpu_custom_call.1} parent=31 // pred_check_branch
          %590 = sbr.rel (%p588) target = $region56
        $region55: #{tpu_custom_call.1} parent=31 // pred_region
          %s591 = smul.u32 2, %s27
          %s593 = ssub.s32 64, 64
          %594 = vsyncadd %s584, %s593
          %s595 = smul.addr %s26, 6
          %s596 = sadd.s32 %s591, %s595
          %s597 = smul.addr %s596, 32
          %s598 = scalar_lea.hbm %s3, %s597
          %s600 = sshll.u32 %s587, 4
          %s601 = int_to_ptr.vmem [resolvable:$true] %s600
          %603 = dma.vmem_to_hbm [thread:$0]  %s601, 64, %s598, %s584
        $region56: #{tpu_custom_call.1} parent=31 // pred_fallthru
          _
      $region32: #{tpu_custom_call.1} parent=5 // pred_fallthru
        _
      %p604 = scmp.le.s32.totalorder 2, %s16
      // Predicated region
      $region57: #{tpu_custom_call.1} parent=5 // pred_check
        %p605 = pneg %p604
      $region58: #{tpu_custom_call.1} parent=5 // pred_check_branch
        %607 = sbr.rel (%p605) target = $region60
      $region59: #{tpu_custom_call.1} parent=5 // pred_region
        %s608 = ssub.s32 %s16, 2
        // Predicated region
        $region61: #{tpu_custom_call.1} parent=59 // pred_check
          %p609 = pneg %p148
        $region62: #{tpu_custom_call.1} parent=59 // pred_check_branch
          %611 = sbr.rel (%p609) target = $region64
        $region63: #{tpu_custom_call.1} parent=59 // pred_region
          %s612 = sand.u32 %s133, 1
          %s613 = scalar_lea.sflag [#allocation5], %s612
          %s614 = sand.u32 %s133, 1
          %s615 = smul.addr %s614, 4
          %s616 = scalar_lea.vmem [#allocation9], %s615
          %617 = dma.done %s613, 64
        $region64: #{tpu_custom_call.1} parent=59 // pred_fallthru
          _
      $region60: #{tpu_custom_call.1} parent=5 // pred_fallthru
        _
    $region6: #{tpu_custom_call.1} parent=1 // loop_footer
      %s20 = sadd.s32 1, %s16
    $region7: #{tpu_custom_call.1} parent=1 // loop_footer_branch
      %15 = sbr.rel target = $region3
    $region8: #{tpu_custom_call.1} parent=1 // loop_exit
      _
    %618 = vsyncpa [#allocation4], 1
    %s619 = scalar_lea.sflag [#allocation4], 1
    %620 = vsyncpa %s619, 1
    %621 = vsyncpa [#allocation7], 1
    %s622 = scalar_lea.sflag [#allocation7], 1
    %623 = vsyncpa %s622, 1
    %624 = vsyncpa [#allocation5], 1
    %s625 = scalar_lea.sflag [#allocation5], 1
    %626 = vsyncpa %s625, 1

</llo_original>
